<compile_context>
chip_gen: v7x
topology: tpu7x:2x2x1
jax: 0.10.0
libtpu: 0.0.40
codegen_flags: <defaults>
</compile_context>

<pallas_src>
import jax
import jax.numpy as jnp
import numpy as np
from jax.experimental import pallas as pl
from jax.experimental.pallas import tpu as pltpu

_LANE = 128          # vreg lane width
# Row tile for the tiled path: 2 (in+out) * 2 (double buffer) * 512 rows of a
# lane-padded f32 row stays far under the 32 MiB scoped-VMEM default even on
# v7x (64 MiB physical VMEM per TensorCore).
_TILE_M = 512
# Below this size a single whole-array block (no grid) is strictly better:
# per-grid-step overhead (~0.35 us) would dominate.
_SMALL_BYTES = 1 << 20


def _identity_kernel(param_ref, out_ref):
    # forward() returns the parameter unchanged.
    out_ref[...] = param_ref[...]


def _whole_block_copy(x: jax.Array) -> jax.Array:
    """Tiny/medium parameter: one whole-array VMEM block, no grid."""
    return pl.pallas_call(
        _identity_kernel,
        out_shape=jax.ShapeDtypeStruct(x.shape, x.dtype),
        in_specs=[pl.BlockSpec(memory_space=pltpu.MemorySpace.VMEM)],
        out_specs=pl.BlockSpec(memory_space=pltpu.MemorySpace.VMEM),
        # Identity forward: let the output alias the parameter buffer.
        input_output_aliases={0: 0},
    )(x)


def _tiled_copy(x: jax.Array, tile_m: int) -> jax.Array:
    """Large parameter: row-tiled copy.

    Keeps the DMA pipeline double-buffered at the HBM roofline instead of
    forcing the whole array (x2 in/out, x2 double-buffer) into VMEM, and the
    "parallel" row axis lets v7x shard tiles across its 2 TensorCores.
    """
    n_rows, n_cols = x.shape
    grid = (pl.cdiv(n_rows, tile_m),)
    return pl.pallas_call(
        _identity_kernel,
        out_shape=jax.ShapeDtypeStruct(x.shape, x.dtype),
        grid=grid,
        in_specs=[pl.BlockSpec((tile_m, n_cols), lambda i: (i, 0))],
        out_specs=pl.BlockSpec((tile_m, n_cols), lambda i: (i, 0)),
        input_output_aliases={0: 0},
        compiler_params=pltpu.CompilerParams(
            dimension_semantics=("parallel",),
        ),
    )(x)


def qlogvar_forward(q_logvar: jax.Array) -> jax.Array:
    """Pallas equivalent of QLogVar.forward(): returns the parameter tensor.

    Note: the zero-cost implementation is `return q_logvar` (PyTorch returns
    the parameter aliased, with no data movement).  The Pallas path below is
    kept because a kernel is required; it aliases output to input so it adds
    no extra HBM allocation.
    """
    n_objects, init_dim = q_logvar.shape
    nbytes = q_logvar.size * q_logvar.dtype.itemsize

    x = q_logvar
    orig_shape = x.shape
    # Lane-dense layout: if the last dim is narrower than a vreg (128 lanes),
    # present the data as (-1, 128) so every store is an unmasked full vst.
    if init_dim < _LANE and (n_objects * init_dim) % _LANE == 0:
        x = x.reshape(-1, _LANE)

    if nbytes <= _SMALL_BYTES:
        out = _whole_block_copy(x)
    else:
        tile_m = min(_TILE_M, x.shape[0])
        out = _tiled_copy(x, tile_m)

    return out.reshape(orig_shape)


if __name__ == "__main__":
    # Deterministic parameter init (synthetic; no checkpoint load).
    n_objects, init_dim = 16, 32
    key = jax.random.PRNGKey(0)
    q_logvar = jax.random.normal(key, (n_objects, init_dim), dtype=jnp.float32)

    # Host snapshot taken before the call (robust even if the parameter buffer
    # is donated/aliased into the kernel output).
    expected = np.asarray(q_logvar)

    out = qlogvar_forward(q_logvar)
    out = jax.block_until_ready(out)

    # Sanity check: forward() must return the parameter exactly (bitwise).
    assert out.shape == (n_objects, init_dim)
    assert out.dtype == jnp.float32
    assert np.array_equal(np.asarray(out), expected)

    print("KERNEL_OK")
</pallas_src>

<mosaic_0001>
module attributes {stable_mosaic.version = 11 : i64} {
  func.func @_identity_kernel(%arg0: memref<4x128xf32, #tpu.memory_space<vmem>>, %arg1: memref<4x128xf32, #tpu.memory_space<vmem>>) attributes {dimension_semantics = [], scalar_prefetch = 0 : i64, scratch_operands = 0 : i64, tpu.core_type = #tpu.core_type<tc>} {
    %c0 = arith.constant 0 : index
    %c0_0 = arith.constant 0 : index
    %0 = vector.load %arg0[%c0, %c0_0] : memref<4x128xf32, #tpu.memory_space<vmem>>, vector<4x128xf32>
    %c0_1 = arith.constant 0 : index
    %c0_2 = arith.constant 0 : index
    %1 = vector.load %arg1[%c0_1, %c0_2] : memref<4x128xf32, #tpu.memory_space<vmem>>, vector<4x128xf32>
    tpu.vector_store %arg1[%c0_1, %c0_2], %0 {strides = array<i32>} : memref<4x128xf32, #tpu.memory_space<vmem>>, vector<4x128xf32>,
    return
  }
}

</mosaic_0001>

<llo_original>
// kernel: tpu_custom_call.1
$region0: #{tpu_custom_call.1}
  #allocation0 [shape = 'u32[]', space=smem, size = 0x4, offset = 0x4, fixed_abs, tag = 'smem constant byte address 0x4 - core index']
  #allocation1 [shape = 'u32[144,128]{1,0:T(1,128)}', space=vmem, size = 0x12000, scoped, tag = 'internal scratch']
  %s0 = inlined_call_operand.hbm [shape: f32[4,128], index: 0, kind: input, shape index: {}, may-alias: {0,1}]
  %s1 = inlined_call_operand.hbm [shape: f32[4,128], index: 1, kind: output, shape index: {}, may-alias: {0,1}]
  %s2 = sld [smem:[#allocation0]]
  $region18: #{tpu_custom_call.1} parent=0
    _
  %s4 = ssub.s32 1, %s2
  %s5 = scalar_select 0, %s4, %s2
  $region1: #{tpu_custom_call.1} parent=0
    #allocation2 [shape = 'u8[2048]{0}', space=vmem, size = 0x800, scoped, tag = 'input window, operand 0, single buffered']
    #allocation3 [shape = 's32[1]{0}', space=sflag, size = 0x4, scoped, tag = 'scoped memory for tpu_custom_call.1']
    #allocation4 [shape = 's32[1]{0}', space=sflag, size = 0x4, scoped, tag = 'scoped memory for tpu_custom_call.1']
    #allocation5 [shape = 'u8[2048]{0}', space=vmem, size = 0x800, scoped, tag = 'output window, operand 0, single buffered']
    %6 = vsyncpa [#allocation3], 0
    %7 = vsyncpa [#allocation4], 0
    // Predicated region
    $region2: #{tpu_custom_call.1} parent=1 // pred_check
      _
    $region3: #{tpu_custom_call.1} parent=1 // pred_check_branch
      %9 = sbr.rel (0) target = $region5
    $region4: #{tpu_custom_call.1} parent=1 // pred_region
      %s11 = ssub.s32 64, 64
      %12 = vsyncadd [#allocation3], %s11
      %s14 = sshll.u32 [#allocation2], 4
      %s15 = int_to_ptr.vmem [resolvable:$true] %s14
      %17 = dma.hbm_to_vmem [thread:$0]  %s0, 64, %s15, [#allocation3]
    $region5: #{tpu_custom_call.1} parent=1 // pred_fallthru
      _
    // Predicated region
    $region6: #{tpu_custom_call.1} parent=1 // pred_check
      _
    $region7: #{tpu_custom_call.1} parent=1 // pred_check_branch
      %19 = sbr.rel (0) target = $region9
    $region8: #{tpu_custom_call.1} parent=1 // pred_region
      %20 = dma.done [#allocation3], 64
    $region9: #{tpu_custom_call.1} parent=1 // pred_fallthru
      _
    %v21 = vld [vmem:[#allocation2] sm:$0xf]
    %22 = vst [vmem:[#allocation5] sm:$0xf] %v21
    // Predicated region
    $region10: #{tpu_custom_call.1} parent=1 // pred_check
      _
    $region11: #{tpu_custom_call.1} parent=1 // pred_check_branch
      %24 = sbr.rel (0) target = $region13
    $region12: #{tpu_custom_call.1} parent=1 // pred_region
      %s26 = ssub.s32 64, 64
      %27 = vsyncadd [#allocation4], %s26
      %s29 = sshll.u32 [#allocation5], 4
      %s30 = int_to_ptr.vmem [resolvable:$true] %s29
      %32 = dma.vmem_to_hbm [thread:$0]  %s30, 64, %s1, [#allocation4]
    $region13: #{tpu_custom_call.1} parent=1 // pred_fallthru
      _
    // Predicated region
    $region14: #{tpu_custom_call.1} parent=1 // pred_check
      _
    $region15: #{tpu_custom_call.1} parent=1 // pred_check_branch
      %34 = sbr.rel (0) target = $region17
    $region16: #{tpu_custom_call.1} parent=1 // pred_region
      %35 = dma.done [#allocation4], 64
    $region17: #{tpu_custom_call.1} parent=1 // pred_fallthru
      _
    %36 = vsyncpa [#allocation3], 1
    %37 = vsyncpa [#allocation4], 1

</llo_original>
